<compile_context>
chip_gen: v5e
topology: v5e:2x2
jax: 0.10.0
libtpu: 0.0.40
codegen_flags: <defaults>
</compile_context>

<pallas_src>
import functools

import jax
import jax.numpy as jnp
from jax import lax
from jax.experimental import pallas as pl
from jax.experimental.pallas import tpu as pltpu


def _masked_ce_kernel(res_ref, gt_ref, mask_ref, loss_ref, msum_ref, *,
                      with_softmax, n_chunks, tpi, tp, p_total, unroll):
    # res_ref:  (C, TP)   native float dtype (f32 / bf16), VMEM block
    # gt_ref:   (1, TP)   int8 / int32
    # mask_ref: (1, TP)   bf16 / f32
    # loss_ref, msum_ref: (1, 1) f32 accumulators, resident across the P sweep.
    p_tile = pl.program_id(1)
    base = p_tile * tp                       # global element offset of block

    @pl.when(p_tile == 0)
    def _():
        loss_ref[...] = jnp.zeros_like(loss_ref)
        msum_ref[...] = jnp.zeros_like(msum_ref)

    C = res_ref.shape[0]
    # Loop-invariant iotas, hoisted (JAX does not CSE broadcast/iota).
    cls = lax.broadcasted_iota(jnp.int32, (C, tpi), 0)      # class ids
    lane = lax.broadcasted_iota(jnp.int32, (1, tpi), 1)     # lane ids

    def body(j, carry):
        loss_acc, mask_acc = carry
        start = pl.multiple_of(j * tpi, 128)
        x = res_ref[:, pl.ds(start, tpi)].astype(jnp.float32)    # (C, tpi)
        g = gt_ref[:, pl.ds(start, tpi)].astype(jnp.int32)       # (1, tpi)
        w = mask_ref[:, pl.ds(start, tpi)].astype(jnp.float32)   # (1, tpi)

        # Gather x[gt] via one-hot select + sublane reduce over C.
        picked = jnp.sum(jnp.where(cls == g, x, 0.0),
                         axis=0, keepdims=True)                   # (1, tpi)

        if with_softmax:
            m = jnp.max(x, axis=0, keepdims=True)                 # (1, tpi)
            s = jnp.sum(jnp.exp(x - m), axis=0, keepdims=True)    # (1, tpi)
            loss = (jnp.log(s) + m) - picked                      # -log_softmax[gt]
        else:
            # NLL on probabilities: gather first, log only the picked value.
            loss = -jnp.log(picked)

        # Ragged-tail lanes (global index >= P) hold garbage logits/gt/mask:
        # exclude them with a select (garbage can be inf/NaN, so *0 is unsafe).
        valid = (base + start + lane) < p_total
        loss_acc = loss_acc + jnp.where(valid, loss * w, 0.0)
        mask_acc = mask_acc + jnp.where(valid, w, 0.0)
        return loss_acc, mask_acc

    zero = jnp.zeros((1, tpi), jnp.float32)
    loss_acc, mask_acc = lax.fori_loop(0, n_chunks, body, (zero, zero),
                                       unroll=unroll)

    # One cross-lane (XLU) reduction per grid step, then accumulate into the
    # resident per-sample output block.
    loss_ref[...] += jnp.sum(loss_acc, axis=1, keepdims=True)
    msum_ref[...] += jnp.sum(mask_acc, axis=1, keepdims=True)


def masked_cross_entropy_loss(res, gt, mask, with_softmax=True):
    """res: (N, C, H, W) float; gt: (N, H, W) int; mask: (N, H, W) float -> scalar."""
    N, C, H, W = res.shape
    P = H * W
    itemsize = res.dtype.itemsize

    # ---- tile sizing ------------------------------------------------------
    # Chunk width adapted to C so (C, tpi) f32 intermediates fit in vregs.
    if C <= 32:
        tpi = 512
    elif C <= 64:
        tpi = 256
    else:
        tpi = 128

    target_bytes = 4 << 20                       # ~4 MiB logits per block
    chunks_needed = -(-P // tpi)
    chunks = max(1, min(64, target_bytes // (C * tpi * itemsize), chunks_needed))
    chunks = 1 << (chunks.bit_length() - 1)      # power of two -> clean unroll
    TP = chunks * tpi
    PT = -(-P // TP)                             # number of P tiles (ragged tail ok)

    # ---- free reshapes + narrow side-band dtypes --------------------------
    res3 = res.reshape(N, C, P)                  # no pad, no transpose, no copy
    gt_dtype = jnp.int8 if C <= 127 else jnp.int32
    gt3 = gt.reshape(N, 1, P).astype(gt_dtype)
    mask3 = mask.reshape(N, 1, P)
    if mask3.dtype.itemsize > 2:                 # 0/1 (and simple-weight) masks are
        mask3 = mask3.astype(jnp.bfloat16)       # exact in bf16; halves HBM bytes

    kernel = functools.partial(
        _masked_ce_kernel, with_softmax=with_softmax, n_chunks=chunks,
        tpi=tpi, tp=TP, p_total=P, unroll=min(chunks, 4))

    work = N * PT * TP
    bytes_accessed = int(res3.size * itemsize + gt3.size * gt3.dtype.itemsize +
                         mask3.size * mask3.dtype.itemsize + 2 * N * 4)
    if with_softmax:
        flops = int(work * (6 * C + 10))
        transcendentals = int(work * (C + 1))
    else:
        flops = int(work * (3 * C + 8))
        transcendentals = int(work)

    loss_part, mask_part = pl.pallas_call(
        kernel,
        grid=(N, PT),
        in_specs=[
            pl.BlockSpec((None, C, TP), lambda n, p: (n, 0, p)),   # logits
            pl.BlockSpec((None, 1, TP), lambda n, p: (n, 0, p)),   # gt
            pl.BlockSpec((None, 1, TP), lambda n, p: (n, 0, p)),   # mask
        ],
        out_specs=[
            pl.BlockSpec((None, 1, 1), lambda n, p: (n, 0, 0)),    # sum(loss*mask)
            pl.BlockSpec((None, 1, 1), lambda n, p: (n, 0, 0)),    # sum(mask)
        ],
        out_shape=[
            jax.ShapeDtypeStruct((N, 1, 1), jnp.float32),
            jax.ShapeDtypeStruct((N, 1, 1), jnp.float32),
        ],
        compiler_params=pltpu.CompilerParams(
            dimension_semantics=("parallel", "arbitrary"),
            vmem_limit_bytes=32 * 1024 * 1024,
        ),
        cost_estimate=pl.CostEstimate(
            flops=flops, transcendentals=transcendentals,
            bytes_accessed=bytes_accessed),
    )(res3, gt3, mask3)

    sample_loss = loss_part[:, 0, 0] / mask_part[:, 0, 0]   # (N,)
    return jnp.mean(sample_loss)


if __name__ == "__main__":
    key = jax.random.PRNGKey(0)
    k1, k2, k3 = jax.random.split(key, 3)

    loss_fn = jax.jit(masked_cross_entropy_loss, static_argnames=("with_softmax",))

    def ref_loss(res, gt, mask):
        logp = jax.nn.log_softmax(res, axis=1)
        nll = -jnp.take_along_axis(logp, gt[:, None, :, :], axis=1)[:, 0]
        return jnp.mean(jnp.sum(nll * mask, axis=(1, 2)) / jnp.sum(mask, axis=(1, 2)))

    # --- small shape consistent with the module ---
    N, C, H, W = 2, 4, 16, 16
    res = jax.random.normal(k1, (N, C, H, W), dtype=jnp.float32)
    gt = jax.random.randint(k2, (N, H, W), 0, C).astype(jnp.int32)
    mask = (jax.random.uniform(k3, (N, H, W)) > 0.3).astype(jnp.float32)

    out = jax.block_until_ready(loss_fn(res, gt, mask, with_softmax=True))
    ref = ref_loss(res, gt, mask)
    assert jnp.allclose(out, ref, rtol=1e-5, atol=1e-5), (float(out), float(ref))

    # with_softmax=False path (NLLLoss on probabilities)
    probs = jax.nn.softmax(res, axis=1)
    out2 = jax.block_until_ready(loss_fn(probs, gt, mask, with_softmax=False))
    assert jnp.allclose(out2, ref, rtol=1e-4, atol=1e-5), (float(out2), float(ref))

    # larger spatial size -> multi-chunk + multi-tile path with a ragged tail
    H2 = W2 = 48
    r2 = jax.random.normal(k1, (N, C, H2, W2), dtype=jnp.float32)
    g2 = jax.random.randint(k2, (N, H2, W2), 0, C).astype(jnp.int32)
    m2 = (jax.random.uniform(k3, (N, H2, W2)) > 0.3).astype(jnp.float32)
    out3 = jax.block_until_ready(loss_fn(r2, g2, m2, with_softmax=True))
    ref3 = ref_loss(r2, g2, m2)
    assert jnp.allclose(out3, ref3, rtol=1e-5, atol=1e-5), (float(out3), float(ref3))

    print("KERNEL_OK")
</pallas_src>

<mosaic_0001>
module attributes {stable_mosaic.version = 11 : i64} {
  func.func @_masked_ce_kernel(%arg0: i32, %arg1: i32, %arg2: memref<1x4x512xf32, #tpu.memory_space<vmem>>, %arg3: memref<1x1x512xi8, #tpu.memory_space<vmem>>, %arg4: memref<1x1x512xbf16, #tpu.memory_space<vmem>>, %arg5: memref<1x1x1xf32, #tpu.memory_space<vmem>>, %arg6: memref<1x1x1xf32, #tpu.memory_space<vmem>>) attributes {dimension_semantics = [#tpu.dimension_semantics<parallel>, #tpu.dimension_semantics<arbitrary>], iteration_bounds = array<i64: 2, 1>, scalar_prefetch = 0 : i64, scratch_operands = 0 : i64, tpu.core_type = #tpu.core_type<tc>, window_params = [{transform_indices = @transform_0, window_bounds = array<i64: 1, 4, 512>}, {transform_indices = @transform_1, window_bounds = array<i64: 1, 1, 512>}, {transform_indices = @transform_2, window_bounds = array<i64: 1, 1, 512>}, {transform_indices = @transform_3, window_bounds = array<i64: 1, 1, 1>}, {transform_indices = @transform_4, window_bounds = array<i64: 1, 1, 1>}]} {
    %c512_i32 = arith.constant 512 : i32
    %0 = arith.muli %arg1, %c512_i32 : i32
    %c0_i32 = arith.constant 0 : i32
    %1 = arith.cmpi eq, %arg1, %c0_i32 : i32
    %2 = arith.extui %1 : i1 to i32
    %c0_i32_0 = arith.constant 0 : i32
    %3 = arith.cmpi ne, %2, %c0_i32_0 : i32
    scf.if %3 {
      %cst_28 = arith.constant 0.000000e+00 : f32
      %64 = vector.broadcast %cst_28 : f32 to vector<1x1xf32>
      %c0_29 = arith.constant 0 : index
      %c0_30 = arith.constant 0 : index
      %c0_31 = arith.constant 0 : index
      %65 = vector.load %arg5[%c0_29, %c0_30, %c0_31] : memref<1x1x1xf32, #tpu.memory_space<vmem>>, vector<1x1x1xf32>
      %66 = vector.shape_cast %65 : vector<1x1x1xf32> to vector<1x1xf32>
      %67 = vector.shape_cast %64 : vector<1x1xf32> to vector<1x1x1xf32>
      tpu.vector_store %arg5[%c0_29, %c0_30, %c0_31], %67 {strides = array<i32>} : memref<1x1x1xf32, #tpu.memory_space<vmem>>, vector<1x1x1xf32>,
      %cst_32 = arith.constant 0.000000e+00 : f32
      %68 = vector.broadcast %cst_32 : f32 to vector<1x1xf32>
      %c0_33 = arith.constant 0 : index
      %c0_34 = arith.constant 0 : index
      %c0_35 = arith.constant 0 : index
      %69 = vector.load %arg6[%c0_33, %c0_34, %c0_35] : memref<1x1x1xf32, #tpu.memory_space<vmem>>, vector<1x1x1xf32>
      %70 = vector.shape_cast %69 : vector<1x1x1xf32> to vector<1x1xf32>
      %71 = vector.shape_cast %68 : vector<1x1xf32> to vector<1x1x1xf32>
      tpu.vector_store %arg6[%c0_33, %c0_34, %c0_35], %71 {strides = array<i32>} : memref<1x1x1xf32, #tpu.memory_space<vmem>>, vector<1x1x1xf32>,
    } else {
    }
    %4 = tpu.iota {dimensions = array<i32: 0>} : vector<4x512xi32>
    %5 = tpu.iota {dimensions = array<i32: 1>} : vector<1x512xi32>
    %cst = arith.constant 0.000000e+00 : f32
    %6 = vector.broadcast %cst : f32 to vector<1x512xf32>
    %c0_i32_1 = arith.constant 0 : i32
    %c512_i32_2 = arith.constant 512 : i32
    %7 = arith.muli %c0_i32_1, %c512_i32_2 : i32
    %8 = tpu.assume_multiple %7, 128 : i32
    %c0 = arith.constant 0 : index
    %c0_3 = arith.constant 0 : index
    %9 = arith.index_cast %8 : i32 to index
    %10 = vector.load %arg2[%c0, %c0_3, %9] : memref<1x4x512xf32, #tpu.memory_space<vmem>>, vector<1x4x512xf32>
    %11 = vector.shape_cast %10 : vector<1x4x512xf32> to vector<4x512xf32>
    %c0_4 = arith.constant 0 : index
    %c0_5 = arith.constant 0 : index
    %12 = arith.index_cast %8 : i32 to index
    %13 = vector.load %arg3[%c0_4, %c0_5, %12] : memref<1x1x512xi8, #tpu.memory_space<vmem>>, vector<1x1x512xi8>
    %14 = vector.shape_cast %13 : vector<1x1x512xi8> to vector<1x512xi8>
    %15 = arith.extsi %14 : vector<1x512xi8> to vector<1x512xi32>
    %c0_6 = arith.constant 0 : index
    %c0_7 = arith.constant 0 : index
    %16 = arith.index_cast %8 : i32 to index
    %17 = vector.load %arg4[%c0_6, %c0_7, %16] : memref<1x1x512xbf16, #tpu.memory_space<vmem>>, vector<1x1x512xbf16>
    %18 = vector.shape_cast %17 : vector<1x1x512xbf16> to vector<1x512xbf16>
    %19 = arith.extf %18 : vector<1x512xbf16> to vector<1x512xf32>
    %20 = vector.broadcast %15 : vector<1x512xi32> to vector<4x512xi32>
    %21 = arith.cmpi eq, %4, %20 : vector<4x512xi32>
    %cst_8 = arith.constant 0.000000e+00 : f32
    %22 = vector.broadcast %cst_8 : f32 to vector<4x512xf32>
    %23 = arith.select %21, %11, %22 : vector<4x512xi1>, vector<4x512xf32>
    %cst_9 = arith.constant dense<0.000000e+00> : vector<512xf32>
    %24 = vector.multi_reduction <add>, %23, %cst_9 [0] : vector<4x512xf32> to vector<512xf32>
    %25 = vector.shape_cast %24 : vector<512xf32> to vector<1x512xf32>
    %cst_10 = arith.constant dense<0xFF800000> : vector<512xf32>
    %26 = vector.multi_reduction <maximumf>, %11, %cst_10 [0] : vector<4x512xf32> to vector<512xf32>
    %27 = vector.shape_cast %26 : vector<512xf32> to vector<1x512xf32>
    %28 = vector.broadcast %27 : vector<1x512xf32> to vector<4x512xf32>
    %29 = arith.subf %11, %28 : vector<4x512xf32>
    %30 = math.exp %29 : vector<4x512xf32>
    %cst_11 = arith.constant dense<0.000000e+00> : vector<512xf32>
    %31 = vector.multi_reduction <add>, %30, %cst_11 [0] : vector<4x512xf32> to vector<512xf32>
    %32 = vector.shape_cast %31 : vector<512xf32> to vector<1x512xf32>
    %33 = math.log %32 : vector<1x512xf32>
    %34 = arith.addf %33, %27 : vector<1x512xf32>
    %35 = arith.subf %34, %25 : vector<1x512xf32>
    %36 = arith.addi %0, %8 : i32
    %37 = vector.broadcast %36 : i32 to vector<1x512xi32>
    %38 = arith.addi %37, %5 : vector<1x512xi32>
    %c256_i32 = arith.constant 256 : i32
    %39 = vector.broadcast %c256_i32 : i32 to vector<1x512xi32>
    %40 = arith.cmpi slt, %38, %39 : vector<1x512xi32>
    %41 = arith.mulf %35, %19 : vector<1x512xf32>
    %cst_12 = arith.constant 0.000000e+00 : f32
    %42 = vector.broadcast %cst_12 : f32 to vector<1x512xf32>
    %43 = arith.select %40, %41, %42 : vector<1x512xi1>, vector<1x512xf32>
    %44 = arith.addf %6, %43 : vector<1x512xf32>
    %cst_13 = arith.constant 0.000000e+00 : f32
    %45 = vector.broadcast %cst_13 : f32 to vector<1x512xf32>
    %46 = arith.select %40, %19, %45 : vector<1x512xi1>, vector<1x512xf32>
    %47 = arith.addf %6, %46 : vector<1x512xf32>
    %c1_i32 = arith.constant 1 : i32
    %c0_14 = arith.constant 0 : index
    %c0_15 = arith.constant 0 : index
    %c0_16 = arith.constant 0 : index
    %48 = vector.load %arg5[%c0_14, %c0_15, %c0_16] : memref<1x1x1xf32, #tpu.memory_space<vmem>>, vector<1x1x1xf32>
    %49 = vector.shape_cast %48 : vector<1x1x1xf32> to vector<1x1xf32>
    %cst_17 = arith.constant dense<0.000000e+00> : vector<1xf32>
    %50 = vector.multi_reduction <add>, %44, %cst_17 [1] : vector<1x512xf32> to vector<1xf32>
    %51 = vector.shape_cast %50 : vector<1xf32> to vector<1x1xf32>
    %52 = arith.addf %49, %51 : vector<1x1xf32>
    %c0_18 = arith.constant 0 : index
    %c0_19 = arith.constant 0 : index
    %c0_20 = arith.constant 0 : index
    %53 = vector.load %arg5[%c0_18, %c0_19, %c0_20] : memref<1x1x1xf32, #tpu.memory_space<vmem>>, vector<1x1x1xf32>
    %54 = vector.shape_cast %53 : vector<1x1x1xf32> to vector<1x1xf32>
    %55 = vector.shape_cast %52 : vector<1x1xf32> to vector<1x1x1xf32>
    tpu.vector_store %arg5[%c0_18, %c0_19, %c0_20], %55 {strides = array<i32>} : memref<1x1x1xf32, #tpu.memory_space<vmem>>, vector<1x1x1xf32>,
    %c0_21 = arith.constant 0 : index
    %c0_22 = arith.constant 0 : index
    %c0_23 = arith.constant 0 : index
    %56 = vector.load %arg6[%c0_21, %c0_22, %c0_23] : memref<1x1x1xf32, #tpu.memory_space<vmem>>, vector<1x1x1xf32>
    %57 = vector.shape_cast %56 : vector<1x1x1xf32> to vector<1x1xf32>
    %cst_24 = arith.constant dense<0.000000e+00> : vector<1xf32>
    %58 = vector.multi_reduction <add>, %47, %cst_24 [1] : vector<1x512xf32> to vector<1xf32>
    %59 = vector.shape_cast %58 : vector<1xf32> to vector<1x1xf32>
    %60 = arith.addf %57, %59 : vector<1x1xf32>
    %c0_25 = arith.constant 0 : index
    %c0_26 = arith.constant 0 : index
    %c0_27 = arith.constant 0 : index
    %61 = vector.load %arg6[%c0_25, %c0_26, %c0_27] : memref<1x1x1xf32, #tpu.memory_space<vmem>>, vector<1x1x1xf32>
    %62 = vector.shape_cast %61 : vector<1x1x1xf32> to vector<1x1xf32>
    %63 = vector.shape_cast %60 : vector<1x1xf32> to vector<1x1x1xf32>
    tpu.vector_store %arg6[%c0_25, %c0_26, %c0_27], %63 {strides = array<i32>} : memref<1x1x1xf32, #tpu.memory_space<vmem>>, vector<1x1x1xf32>,
    return
  }
  func.func @transform_0(%arg0: i32, %arg1: i32) -> (i32, i32, i32) {
    %c0_i32 = arith.constant 0 : i32
    %c0_i32_0 = arith.constant 0 : i32
    return %arg0, %c0_i32, %arg1 : i32, i32, i32
  }
  func.func @transform_1(%arg0: i32, %arg1: i32) -> (i32, i32, i32) {
    %c0_i32 = arith.constant 0 : i32
    %c0_i32_0 = arith.constant 0 : i32
    return %arg0, %c0_i32, %arg1 : i32, i32, i32
  }
  func.func @transform_2(%arg0: i32, %arg1: i32) -> (i32, i32, i32) {
    %c0_i32 = arith.constant 0 : i32
    %c0_i32_0 = arith.constant 0 : i32
    return %arg0, %c0_i32, %arg1 : i32, i32, i32
  }
  func.func @transform_3(%arg0: i32, %arg1: i32) -> (i32, i32, i32) {
    %c0_i32 = arith.constant 0 : i32
    %c0_i32_0 = arith.constant 0 : i32
    %c0_i32_1 = arith.constant 0 : i32
    return %arg0, %c0_i32, %c0_i32_0 : i32, i32, i32
  }
  func.func @transform_4(%arg0: i32, %arg1: i32) -> (i32, i32, i32) {
    %c0_i32 = arith.constant 0 : i32
    %c0_i32_0 = arith.constant 0 : i32
    %c0_i32_1 = arith.constant 0 : i32
    return %arg0, %c0_i32, %c0_i32_0 : i32, i32, i32
  }
}

</mosaic_0001>

<llo_original>
// kernel: masked_cross_entropy_loss.1
$region0: #{masked_cross_entropy_loss.1}
  #allocation0 [shape = 'u32[]', space=smem, size = 0x4, offset = 0x4, fixed_abs, tag = 'smem constant byte address 0x4 - core index']
  #allocation1 [shape = 'u32[72,128]{1,0:T(1,128)}', space=vmem, size = 0x9000, scoped, tag = 'internal scratch']
  %s0 = inlined_call_operand.vmem [shape: f32[2,4,256], index: 0, kind: input, shape index: {}]
  %s1 = inlined_call_operand.vmem [shape: s8[2,1,256], index: 1, kind: input, shape index: {}]
  %s2 = inlined_call_operand.vmem [shape: bf16[2,1,256], index: 2, kind: input, shape index: {}]
  %s3 = inlined_call_operand.vmem [shape: f32[2,1,1], index: 3, kind: output, shape index: {0}]
  %s4 = inlined_call_operand.vmem [shape: f32[2,1,1], index: 4, kind: output, shape index: {1}]
  %5 = xla_tuple %s3, %s4
  %s6 = sld [smem:[#allocation0]]
  $region57: #{masked_cross_entropy_loss.1} parent=0
    _
  %s8 = ssub.s32 1, %s6
  %s9 = scalar_select 0, %s8, %s6
  loop: start=0, step=1, limit=4
  $region2: #{masked_cross_entropy_loss.1} parent=0 // loop_pre_header
    _
  $region3: #{masked_cross_entropy_loss.1} parent=0 // loop_header
    %s11 = sphi 0, %s15
    %p12 = scmp.ge.s32.totalorder %s11, 4
    %s18 = sphi 0, %s30
    %s19 = sphi 0, %s26
    %s20 = sphi 0, %s18
    %s21 = sphi 0, %s19
    %s22 = sphi 0, %s20
    %s23 = sphi 0, %s21
    %s35 = sphi 0, %s37
    %s38 = sphi 0, %s35
    %s39 = sphi 0, %s38
    %s55 = sphi 0, %s39
    %s63 = sphi 0, %s65
    %s66 = sphi 0, %s63
    %s67 = sphi 0, %s66
    %s83 = sphi 0, %s67
    %s91 = sphi 0, %s93
    %s94 = sphi 0, %s91
    %s95 = sphi 0, %s94
    %s111 = sphi 0, %s95
    %s117 = sphi 0, %s119
    %s120 = sphi 0, %s117
    %s121 = sphi 0, %s120
    %s137 = sphi 0, %s121
    %s143 = sphi 0, %s145
    %s146 = sphi 0, %s143
    %s147 = sphi 0, %s146
    %s163 = sphi 0, %s147
  $region4: #{masked_cross_entropy_loss.1} parent=0 // loop_header_branch
    %14 = sbr.rel (%p12) target = $region8
  $region5: #{masked_cross_entropy_loss.1} parent=0 // loop_body
    %s16 = ssub.s32 %s11, 1
    %s17 = ssub.s32 %s11, 2
    %s24 = sadd.s32 1, %s19
    %p25 = scmp.ge.s32.totalorder %s24, 1
    %s26 = scalar_select %p25, 0, %s24
    %s27 = sadd.s32 1, %s18
    %s28 = scalar_select %p25, %s27, %s18
    %p29 = scmp.ge.s32.totalorder %s28, 2
    %s30 = scalar_select %p29, 0, %s28
    %s31 = ssub.s32 %s18, %s30
    %s32 = ssub.s32 %s19, %s26
    %s33 = sor.u32 %s31, %s32
    %p34 = scmp.eq.s32.totalorder %s33, 0
    %s36 = sadd.s32 %s35, 1
    %s37 = scalar_select %p34, %s35, %s36
    %p40 = pneg %p34
    %p41 = scmp.eq.s32.totalorder %s11, 1
    %p42 = por %p40, %p41
    %p43 = scmp.ne.s32.totalorder %s35, %s38
    %p44 = scmp.eq.s32.totalorder %s11, 0
    %p45 = por %p43, %p44
    %p46 = scmp.ne.s32.totalorder %s35, %s38
    %p47 = scmp.eq.s32.totalorder %s16, 1
    %p48 = por %p46, %p47
    %p49 = scmp.ne.s32.totalorder %s38, %s39
    %p50 = scmp.eq.s32.totalorder %s16, 0
    %p51 = por %p49, %p50
    %p52 = scmp.ne.s32.totalorder %s38, %s39
    %p53 = scmp.eq.s32.totalorder %s17, 1
    %p54 = por %p52, %p53
    %p56 = scmp.ne.s32.totalorder %s39, %s55
    %p57 = scmp.eq.s32.totalorder %s17, 0
    %p58 = por %p56, %p57
    %s59 = ssub.s32 %s18, %s30
    %s60 = ssub.s32 %s19, %s26
    %s61 = sor.u32 %s59, %s60
    %p62 = scmp.eq.s32.totalorder %s61, 0
    %s64 = sadd.s32 %s63, 1
    %s65 = scalar_select %p62, %s63, %s64
    %p68 = pneg %p62
    %p69 = scmp.eq.s32.totalorder %s11, 1
    %p70 = por %p68, %p69
    %p71 = scmp.ne.s32.totalorder %s63, %s66
    %p72 = scmp.eq.s32.totalorder %s11, 0
    %p73 = por %p71, %p72
    %p74 = scmp.ne.s32.totalorder %s63, %s66
    %p75 = scmp.eq.s32.totalorder %s16, 1
    %p76 = por %p74, %p75
    %p77 = scmp.ne.s32.totalorder %s66, %s67
    %p78 = scmp.eq.s32.totalorder %s16, 0
    %p79 = por %p77, %p78
    %p80 = scmp.ne.s32.totalorder %s66, %s67
    %p81 = scmp.eq.s32.totalorder %s17, 1
    %p82 = por %p80, %p81
    %p84 = scmp.ne.s32.totalorder %s67, %s83
    %p85 = scmp.eq.s32.totalorder %s17, 0
    %p86 = por %p84, %p85
    %s87 = ssub.s32 %s18, %s30
    %s88 = ssub.s32 %s19, %s26
    %s89 = sor.u32 %s87, %s88
    %p90 = scmp.eq.s32.totalorder %s89, 0
    %s92 = sadd.s32 %s91, 1
    %s93 = scalar_select %p90, %s91, %s92
    %p96 = pneg %p90
    %p97 = scmp.eq.s32.totalorder %s11, 1
    %p98 = por %p96, %p97
    %p99 = scmp.ne.s32.totalorder %s91, %s94
    %p100 = scmp.eq.s32.totalorder %s11, 0
    %p101 = por %p99, %p100
    %p102 = scmp.ne.s32.totalorder %s91, %s94
    %p103 = scmp.eq.s32.totalorder %s16, 1
    %p104 = por %p102, %p103
    %p105 = scmp.ne.s32.totalorder %s94, %s95
    %p106 = scmp.eq.s32.totalorder %s16, 0
    %p107 = por %p105, %p106
    %p108 = scmp.ne.s32.totalorder %s94, %s95
    %p109 = scmp.eq.s32.totalorder %s17, 1
    %p110 = por %p108, %p109
    %p112 = scmp.ne.s32.totalorder %s95, %s111
    %p113 = scmp.eq.s32.totalorder %s17, 0
    %p114 = por %p112, %p113
    %s115 = ssub.s32 %s18, %s30
    %p116 = scmp.eq.s32.totalorder %s115, 0
    %s118 = sadd.s32 %s117, 1
    %s119 = scalar_select %p116, %s117, %s118
    %p122 = pneg %p116
    %p123 = scmp.eq.s32.totalorder %s11, 1
    %p124 = por %p122, %p123
    %p125 = scmp.ne.s32.totalorder %s117, %s120
    %p126 = scmp.eq.s32.totalorder %s11, 0
    %p127 = por %p125, %p126
    %p128 = scmp.ne.s32.totalorder %s117, %s120
    %p129 = scmp.eq.s32.totalorder %s16, 1
    %p130 = por %p128, %p129
    %p131 = scmp.ne.s32.totalorder %s120, %s121
    %p132 = scmp.eq.s32.totalorder %s16, 0
    %p133 = por %p131, %p132
    %p134 = scmp.ne.s32.totalorder %s120, %s121
    %p135 = scmp.eq.s32.totalorder %s17, 1
    %p136 = por %p134, %p135
    %p138 = scmp.ne.s32.totalorder %s121, %s137
    %p139 = scmp.eq.s32.totalorder %s17, 0
    %p140 = por %p138, %p139
    %s141 = ssub.s32 %s18, %s30
    %p142 = scmp.eq.s32.totalorder %s141, 0
    %s144 = sadd.s32 %s143, 1
    %s145 = scalar_select %p142, %s143, %s144
    %p148 = pneg %p142
    %p149 = scmp.eq.s32.totalorder %s11, 1
    %p150 = por %p148, %p149
    %p151 = scmp.ne.s32.totalorder %s143, %s146
    %p152 = scmp.eq.s32.totalorder %s11, 0
    %p153 = por %p151, %p152
    %p154 = scmp.ne.s32.totalorder %s143, %s146
    %p155 = scmp.eq.s32.totalorder %s16, 1
    %p156 = por %p154, %p155
    %p157 = scmp.ne.s32.totalorder %s146, %s147
    %p158 = scmp.eq.s32.totalorder %s16, 0
    %p159 = por %p157, %p158
    %p160 = scmp.ne.s32.totalorder %s146, %s147
    %p161 = scmp.eq.s32.totalorder %s17, 1
    %p162 = por %p160, %p161
    %p164 = scmp.ne.s32.totalorder %s147, %s163
    %p165 = scmp.eq.s32.totalorder %s17, 0
    %p166 = por %p164, %p165
    %p167 = scmp.le.s32.totalorder 1, %s11
    %p168 = scmp.lt.s32.totalorder %s11, 3
    %p169 = pnand %p167, %p168
    %p170 = pneg %p169
    // Predicated region
    $region9: #{masked_cross_entropy_loss.1} parent=5 // pred_check
      _
    $region10: #{masked_cross_entropy_loss.1} parent=5 // pred_check_branch
      %172 = sbr.rel (%p169) target = $region12
    $region11: #{masked_cross_entropy_loss.1} parent=5 // pred_region
      %s173 = ssub.s32 %s11, 1
    $region12: #{masked_cross_entropy_loss.1} parent=5 // pred_fallthru
      _
    %p174 = scmp.lt.s32.totalorder %s11, 2
    // Predicated region
    $region13: #{masked_cross_entropy_loss.1} parent=5 // pred_check
      %p175 = pneg %p174
    $region14: #{masked_cross_entropy_loss.1} parent=5 // pred_check_branch
      %177 = sbr.rel (%p175) target = $region16
    $region15: #{masked_cross_entropy_loss.1} parent=5 // pred_region
      // Predicated region
      $region17: #{masked_cross_entropy_loss.1} parent=15 // pred_check
        %p178 = pneg %p45
      $region18: #{masked_cross_entropy_loss.1} parent=15 // pred_check_branch
        %180 = sbr.rel (%p178) target = $region20
      $region19: #{masked_cross_entropy_loss.1} parent=15 // pred_region
        %s181 = smul.u32 4, %s19
        %s182 = ssub.s32 2, %s181
        %s183 = smul.u32 4, %s182
        %p184 = scmp.lt.s32.totalorder %s18, 1
        %s185 = scalar_select %p184, %s18, 1
        %p186 = scmp.lt.s32.totalorder %s181, 1
        %s187 = scalar_select %p186, %s181, 1
        %s188 = smul.addr %s185, 2
        %s189 = sadd.s32 %s187, %s188
        %s190 = smul.addr %s189, 4
        %s191 = scalar_lea.vmem %s0, %s190
        %s192 = smul.u32 4, %s19
        %s193 = ssub.s32 2, %s192
        %s194 = smul.u32 4, %s193
      $region20: #{masked_cross_entropy_loss.1} parent=15 // pred_fallthru
        _
      // Predicated region
      $region21: #{masked_cross_entropy_loss.1} parent=15 // pred_check
        %p195 = pneg %p73
      $region22: #{masked_cross_entropy_loss.1} parent=15 // pred_check_branch
        %197 = sbr.rel (%p195) target = $region24
      $region23: #{masked_cross_entropy_loss.1} parent=15 // pred_region
        %s198 = smul.u32 4, %s19
        %s199 = ssub.s32 2, %s198
        %p200 = scmp.lt.s32.totalorder %s18, 1
        %s201 = scalar_select %p200, %s18, 1
        %p202 = scmp.lt.s32.totalorder %s198, 1
        %s203 = scalar_select %p202, %s198, 1
        %s204 = smul.addr %s201, 2
        %s205 = sadd.s32 %s203, %s204
        %s206 = scalar_lea.vmem %s1, %s205
        %s207 = smul.u32 4, %s19
        %s208 = ssub.s32 2, %s207
      $region24: #{masked_cross_entropy_loss.1} parent=15 // pred_fallthru
        _
      // Predicated region
      $region25: #{masked_cross_entropy_loss.1} parent=15 // pred_check
        %p209 = pneg %p101
      $region26: #{masked_cross_entropy_loss.1} parent=15 // pred_check_branch
        %211 = sbr.rel (%p209) target = $region28
      $region27: #{masked_cross_entropy_loss.1} parent=15 // pred_region
        %s212 = smul.u32 4, %s19
        %s213 = ssub.s32 2, %s212
        %p214 = scmp.lt.s32.totalorder %s18, 1
        %s215 = scalar_select %p214, %s18, 1
        %p216 = scmp.lt.s32.totalorder %s212, 1
        %s217 = scalar_select %p216, %s212, 1
        %s218 = smul.addr %s215, 2
        %s219 = sadd.s32 %s217, %s218
        %s220 = scalar_lea.vmem %s2, %s219
        %s221 = smul.u32 4, %s19
        %s222 = ssub.s32 2, %s221
      $region28: #{masked_cross_entropy_loss.1} parent=15 // pred_fallthru
        _
    $region16: #{masked_cross_entropy_loss.1} parent=5 // pred_fallthru
      _
    %p223 = scmp.le.s32.totalorder 1, %s11
    %p224 = scmp.lt.s32.totalorder %s11, 3
    %p225 = pnand %p223, %p224
    %p226 = pneg %p225
    // Predicated region
    $region29: #{masked_cross_entropy_loss.1} parent=5 // pred_check
      _
    $region30: #{masked_cross_entropy_loss.1} parent=5 // pred_check_branch
      %228 = sbr.rel (%p225) target = $region32
    $region31: #{masked_cross_entropy_loss.1} parent=5 // pred_region
      %s229 = ssub.s32 %s11, 1
      %s230 = smul.u32 4, %s21
      %s231 = ssub.s32 2, %s230
      %s232 = smul.u32 4, %s231
      %p233 = scmp.lt.s32.totalorder %s20, 1
      %s234 = scalar_select %p233, %s20, 1
      %p235 = scmp.lt.s32.totalorder %s230, 1
      %s236 = scalar_select %p235, %s230, 1
      %s237 = smul.addr %s234, 2
      %s238 = sadd.s32 %s236, %s237
      %s239 = smul.addr %s238, 4
      %s240 = scalar_lea.vmem %s0, %s239
      %p241 = pneg %p51
      %p242 = pneg %p48
      %s243 = smul.u32 4, %s21
      %s244 = ssub.s32 2, %s243
      %p245 = scmp.lt.s32.totalorder %s20, 1
      %s246 = scalar_select %p245, %s20, 1
      %p247 = scmp.lt.s32.totalorder %s243, 1
      %s248 = scalar_select %p247, %s243, 1
      %s249 = smul.addr %s246, 2
      %s250 = sadd.s32 %s248, %s249
      %s251 = scalar_lea.vmem %s1, %s250
      %p252 = pneg %p79
      %p253 = pneg %p76
      %s254 = smul.u32 4, %s21
      %s255 = ssub.s32 2, %s254
      %p256 = scmp.lt.s32.totalorder %s20, 1
      %s257 = scalar_select %p256, %s20, 1
      %p258 = scmp.lt.s32.totalorder %s254, 1
      %s259 = scalar_select %p258, %s254, 1
      %s260 = smul.addr %s257, 2
      %s261 = sadd.s32 %s259, %s260
      %s262 = scalar_lea.vmem %s2, %s261
      %p263 = pneg %p107
      %p264 = pneg %p104
      %p265 = pneg %p133
      %p266 = pneg %p130
      %p267 = scmp.lt.s32.totalorder %s20, 1
      %s268 = scalar_select %p267, %s20, 1
      %s269 = scalar_lea.vmem %s3, %s268
      %p270 = pneg %p159
      %p271 = pneg %p156
      %p272 = scmp.lt.s32.totalorder %s20, 1
      %s273 = scalar_select %p272, %s20, 1
      %s274 = scalar_lea.vmem %s4, %s273
      %s275 = smul.u32 4, %s21
      %s276 = ssub.s32 2, %s275
      %s277 = smul.u32 4, %s276
      %p278 = scmp.lt.s32.totalorder %s20, 1
      %s279 = scalar_select %p278, %s20, 1
      %p280 = scmp.lt.s32.totalorder %s275, 1
      %s281 = scalar_select %p280, %s275, 1
      %s282 = smul.addr %s279, 2
      %s283 = sadd.s32 %s281, %s282
      %s284 = smul.addr %s283, 4
      %s285 = scalar_lea.vmem %s0, %s284
      %s286 = smul.u32 4, %s21
      %s287 = ssub.s32 2, %s286
      %s288 = smul.u32 4, %s287
      %s289 = smul.u32 4, %s21
      %s290 = ssub.s32 2, %s289
      %p291 = scmp.lt.s32.totalorder %s20, 1
      %s292 = scalar_select %p291, %s20, 1
      %p293 = scmp.lt.s32.totalorder %s289, 1
      %s294 = scalar_select %p293, %s289, 1
      %s295 = smul.addr %s292, 2
      %s296 = sadd.s32 %s294, %s295
      %s297 = scalar_lea.vmem %s1, %s296
      %s298 = smul.u32 4, %s21
      %s299 = ssub.s32 2, %s298
      %s300 = smul.u32 4, %s21
      %s301 = ssub.s32 2, %s300
      %p302 = scmp.lt.s32.totalorder %s20, 1
      %s303 = scalar_select %p302, %s20, 1
      %p304 = scmp.lt.s32.totalorder %s300, 1
      %s305 = scalar_select %p304, %s300, 1
      %s306 = smul.addr %s303, 2
      %s307 = sadd.s32 %s305, %s306
      %s308 = scalar_lea.vmem %s2, %s307
      %s309 = smul.u32 4, %s21
      %s310 = ssub.s32 2, %s309
      %p311 = scmp.lt.s32.totalorder %s20, 1
      %s312 = scalar_select %p311, %s20, 1
      %s313 = scalar_lea.vmem %s3, %s312
      %p314 = scmp.lt.s32.totalorder %s20, 1
      %s315 = scalar_select %p314, %s20, 1
      %s316 = scalar_lea.vmem %s4, %s315
      %s317 = smul.u32 %s21, 512
      %p318 = scmp.eq.s32.totalorder %s21, 0
      // Predicated region
      $region33: #{masked_cross_entropy_loss.1} parent=31 // pred_check
        %p319 = pneg %p318
      $region34: #{masked_cross_entropy_loss.1} parent=31 // pred_check_branch
        %321 = sbr.rel (%p319) target = $region36
      $region35: #{masked_cross_entropy_loss.1} parent=31 // pred_region
        %vm322 = vcmask 0
        %323 = vst.msk [vmem:[%s313] sm:$0x1] %vm322, 0.0
        %324 = vst.msk [vmem:[%s316] sm:$0x1] %vm322, 0.0
      $region36: #{masked_cross_entropy_loss.1} parent=31 // pred_fallthru
        _
      %v325 = vlaneseq
      %v326 = vshrl.u32 %v325, 7
      %v327 = vlaneseq
      %v328 = vand.u32 %v327, 127
      %v329 = vadd.s32 %v328, 128
      %v330 = vadd.s32 %v328, 256
      %v331 = vadd.s32 %v328, 384
      %v332 = vld [vmem:[%s285] sm:$0xff]
      %v333 = vld [vmem:[%s285 + $0x8] sm:$0xff]
      %v334 = vld [vmem:[%s297] sm:$0xf]
      %v335 = vunpack.c.0.s8 %v334
      %v336 = vunpack.c.1.s8 %v334
      %v337 = vld [vmem:[%s308] sm:$0xf]
      %v338 = vunpack.c.l.bf16 %v337
      %v339 = vperm.slane %v335, 0
      %v340 = vperm.slane %v335, 4
      %v341 = vperm.slane %v336, 0
      %v342 = vperm.slane %v336, 4
      %v343 = vperm.slane %v339, 0
      %v344 = vperm.slane %v340, 0
      %v345 = vperm.slane %v341, 0
      %v346 = vperm.slane %v342, 0
      %vm347 = vcmp.eq.s32.totalorder %v326, %v343
      %vm348 = vcmp.eq.s32.totalorder %v326, %v344
      %vm349 = vcmp.eq.s32.totalorder %v326, %v345
      %vm350 = vcmp.eq.s32.totalorder %v326, %v346
      %353 = vst [vmem:[#allocation1] ss:$2 sm:$0xff] %v332
      %s354 = scalar_lea.vmem [#allocation1], 16
      %355 = vst [vmem:[%s354] ss:$2 sm:$0xff] %v333
      %v356 = vld.sshfl [vmem:[#allocation1] sm:$0xff pattern:$0x75316420]
      %v357 = vld.sshfl [vmem:[#allocation1 + $0x8] sm:$0xff pattern:$0x75316420]
      %v358 = vld.sshfl [vmem:[#allocation1 + $0x10] sm:$0xff pattern:$0x75316420]
      %v359 = vld.sshfl [vmem:[#allocation1 + $0x18] sm:$0xff pattern:$0x75316420]
      %v364 = vsel %vm347, %v356, 0.0
      %v365 = vsel %vm348, %v357, 0.0
      %v366 = vsel %vm349, %v358, 0.0
      %v367 = vsel %vm350, %v359, 0.0
      %vm368 = vcmask 1043456
      %v369 = vsel %vm368, %v364, 0.0
      %v370 = vrot.slane %v369, 4
      %v371 = vadd.f32 %v369, %v370
      %v372 = vrot.slane %v371, 2
      %v373 = vadd.f32 %v371, %v372
      %v374 = vrot.slane %v373, 1
      %v375 = vadd.f32 %v373, %v374
      %v376 = vsel %vm368, %v365, 0.0
      %v377 = vrot.slane %v376, 4
      %v378 = vadd.f32 %v376, %v377
      %v379 = vrot.slane %v378, 2
      %v380 = vadd.f32 %v378, %v379
      %v381 = vrot.slane %v380, 1
      %v382 = vadd.f32 %v380, %v381
      %v383 = vsel %vm368, %v366, 0.0
      %v384 = vrot.slane %v383, 4
      %v385 = vadd.f32 %v383, %v384
      %v386 = vrot.slane %v385, 2
      %v387 = vadd.f32 %v385, %v386
      %v388 = vrot.slane %v387, 1
      %v389 = vadd.f32 %v387, %v388
      %v390 = vsel %vm368, %v367, 0.0
      %v391 = vrot.slane %v390, 4
      %v392 = vadd.f32 %v390, %v391
      %v393 = vrot.slane %v392, 2
      %v394 = vadd.f32 %v392, %v393
      %v395 = vrot.slane %v394, 1
      %v396 = vadd.f32 %v394, %v395
      %397 = vst [vmem:[#allocation1] ss:$2 sm:$0xff] %v332
      %s398 = scalar_lea.vmem [#allocation1], 16
      %399 = vst [vmem:[%s398] ss:$2 sm:$0xff] %v333
      %v400 = vld.sshfl [vmem:[#allocation1] sm:$0xff pattern:$0x75316420]
      %v401 = vld.sshfl [vmem:[#allocation1 + $0x8] sm:$0xff pattern:$0x75316420]
      %v402 = vld.sshfl [vmem:[#allocation1 + $0x10] sm:$0xff pattern:$0x75316420]
      %v403 = vld.sshfl [vmem:[#allocation1 + $0x18] sm:$0xff pattern:$0x75316420]
      %v408 = vsel %vm368, %v400, -inf
      %v409 = vrot.slane %v408, 4
      %v410 = vmax.f32 %v408, %v409
      %v411 = vrot.slane %v410, 2
      %v412 = vmax.f32 %v410, %v411
      %v413 = vrot.slane %v412, 1
      %v414 = vmax.f32 %v412, %v413
      %v415 = vsel %vm368, %v401, -inf
      %v416 = vrot.slane %v415, 4
      %v417 = vmax.f32 %v415, %v416
      %v418 = vrot.slane %v417, 2
      %v419 = vmax.f32 %v417, %v418
      %v420 = vrot.slane %v419, 1
      %v421 = vmax.f32 %v419, %v420
      %v422 = vsel %vm368, %v402, -inf
      %v423 = vrot.slane %v422, 4
      %v424 = vmax.f32 %v422, %v423
      %v425 = vrot.slane %v424, 2
      %v426 = vmax.f32 %v424, %v425
      %v427 = vrot.slane %v426, 1
      %v428 = vmax.f32 %v426, %v427
      %v429 = vsel %vm368, %v403, -inf
      %v430 = vrot.slane %v429, 4
      %v431 = vmax.f32 %v429, %v430
      %v432 = vrot.slane %v431, 2
      %v433 = vmax.f32 %v431, %v432
      %v434 = vrot.slane %v433, 1
      %v435 = vmax.f32 %v433, %v434
      %v440 = vrot.slane %v421, 4
      %v441 = vrot.slane %v435, 4
      %v442 = vsel %vm368, %v414, %v440
      %v443 = vsel %vm368, %v428, %v441
      %v446 = vsub.f32 %v332, %v442
      %v447 = vsub.f32 %v333, %v443
      %v448 = vmul.f32 %v446, 1.442695
      %v449 = vpow.pop %v448
      %v450 = vmul.f32 %v447, 1.442695
      %v451 = vpow.pop %v450
      %454 = vst [vmem:[#allocation1] ss:$2 sm:$0xff] %v449
      %s455 = scalar_lea.vmem [#allocation1], 16
      %456 = vst [vmem:[%s455] ss:$2 sm:$0xff] %v451
      %v457 = vld.sshfl [vmem:[#allocation1] sm:$0xff pattern:$0x75316420]
      %v458 = vld.sshfl [vmem:[#allocation1 + $0x8] sm:$0xff pattern:$0x75316420]
      %v459 = vld.sshfl [vmem:[#allocation1 + $0x10] sm:$0xff pattern:$0x75316420]
      %v460 = vld.sshfl [vmem:[#allocation1 + $0x18] sm:$0xff pattern:$0x75316420]
      %v465 = vsel %vm368, %v457, 0.0
      %v466 = vrot.slane %v465, 4
      %v467 = vadd.f32 %v465, %v466
      %v468 = vrot.slane %v467, 2
      %v469 = vadd.f32 %v467, %v468
      %v470 = vrot.slane %v469, 1
      %v471 = vadd.f32 %v469, %v470
      %v472 = vsel %vm368, %v458, 0.0
      %v473 = vrot.slane %v472, 4
      %v474 = vadd.f32 %v472, %v473
      %v475 = vrot.slane %v474, 2
      %v476 = vadd.f32 %v474, %v475
      %v477 = vrot.slane %v476, 1
      %v478 = vadd.f32 %v476, %v477
      %v479 = vsel %vm368, %v459, 0.0
      %v480 = vrot.slane %v479, 4
      %v481 = vadd.f32 %v479, %v480
      %v482 = vrot.slane %v481, 2
      %v483 = vadd.f32 %v481, %v482
      %v484 = vrot.slane %v483, 1
      %v485 = vadd.f32 %v483, %v484
      %v486 = vsel %vm368, %v460, 0.0
      %v487 = vrot.slane %v486, 4
      %v488 = vadd.f32 %v486, %v487
      %v489 = vrot.slane %v488, 2
      %v490 = vadd.f32 %v488, %v489
      %v491 = vrot.slane %v490, 1
      %v492 = vadd.f32 %v490, %v491
      %v493 = vlog2.pop %v471
      %v494 = vmul.f32 %v493, 0.6931472
      %v495 = vlog2.pop %v478
      %v496 = vmul.f32 %v495, 0.6931472
      %v497 = vlog2.pop %v485
      %v498 = vmul.f32 %v497, 0.6931472
      %v499 = vlog2.pop %v492
      %v500 = vmul.f32 %v499, 0.6931472
      %v501 = vadd.f32 %v494, %v414
      %v502 = vadd.f32 %v496, %v421
      %v503 = vadd.f32 %v498, %v428
      %v504 = vadd.f32 %v500, %v435
      %v505 = vsub.f32 %v501, %v375
      %v506 = vsub.f32 %v502, %v382
      %v507 = vsub.f32 %v503, %v389
      %v508 = vsub.f32 %v504, %v396
      %s509 = sadd.s32 %s317, 0
      %v510 = vstv %s509
      %v511 = vadd.s32 %v510, %v328
      %v512 = vadd.s32 %v510, %v329
      %v513 = vadd.s32 %v510, %v330
      %v514 = vadd.s32 %v510, %v331
      %vm515 = vcmp.lt.s32.totalorder %v511, 256
      %vm516 = vcmp.lt.s32.totalorder %v512, 256
      %vm517 = vcmp.lt.s32.totalorder %v513, 256
      %vm518 = vcmp.lt.s32.totalorder %v514, 256
      %v520 = vperm.slane %v338, 0
      %v521 = vperm.slane %v338, 2
      %v522 = vperm.slane %v338, 4
      %v523 = vperm.slane %v338, 6
      %v528 = vmul.f32 %v505, %v520
      %v529 = vmul.f32 %v506, %v521
      %v530 = vmul.f32 %v507, %v522
      %v531 = vmul.f32 %v508, %v523
      %v532 = vsel %vm515, %v528, 0.0
      %v533 = vsel %vm516, %v529, 0.0
      %v534 = vsel %vm517, %v530, 0.0
      %v535 = vsel %vm518, %v531, 0.0
      %v536 = vadd.f32 %v532, 0.0
      %v537 = vadd.f32 %v533, 0.0
      %v538 = vadd.f32 %v534, 0.0
      %v539 = vadd.f32 %v535, 0.0
      %v540 = vsel %vm515, %v520, 0.0
      %v541 = vsel %vm516, %v521, 0.0
      %v542 = vsel %vm517, %v522, 0.0
      %v543 = vsel %vm518, %v523, 0.0
      %v544 = vadd.f32 %v540, 0.0
      %v545 = vadd.f32 %v541, 0.0
      %v546 = vadd.f32 %v542, 0.0
      %v547 = vadd.f32 %v543, 0.0
      %v548 = vld [vmem:[%s313] sm:$0x1]
      %vm549 = vcmask 1040384
      %v550 = vsel %vm549, %v536, 0.0
      %v551 = vsel %vm549, %v537, 0.0
      %v552 = vadd.f32 %v550, %v551
      %v553 = vsel %vm549, %v538, 0.0
      %v554 = vadd.f32 %v552, %v553
      %v555 = vsel %vm549, %v539, 0.0
      %v556 = vadd.f32 %v554, %v555
      %557 = vadd.xlane.f32.xlu0 %v556
      %v558 = vpop.xlane.xlu0 %557
      %v559 = vadd.f32 %v548, %v558
      %vm560 = vcmask 0
      %561 = vst.msk [vmem:[%s313] sm:$0x1] %vm560, %v559
      %v562 = vld [vmem:[%s316] sm:$0x1]
      %v563 = vsel %vm549, %v544, 0.0
      %v564 = vsel %vm549, %v545, 0.0
      %v565 = vadd.f32 %v563, %v564
      %v566 = vsel %vm549, %v546, 0.0
      %v567 = vadd.f32 %v565, %v566
      %v568 = vsel %vm549, %v547, 0.0
      %v569 = vadd.f32 %v567, %v568
      %570 = vadd.xlane.f32.xlu0 %v569
      %v571 = vpop.xlane.xlu0 %570
      %v572 = vadd.f32 %v562, %v571
      %573 = vst.msk [vmem:[%s316] sm:$0x1] %vm560, %v572
      %p574 = scmp.lt.s32.totalorder %s20, 1
      %s575 = scalar_select %p574, %s20, 1
      %s576 = scalar_lea.vmem %s3, %s575
      %p577 = scmp.lt.s32.totalorder %s20, 1
      %s578 = scalar_select %p577, %s20, 1
      %s579 = scalar_lea.vmem %s4, %s578
      // Predicated region
      $region37: #{masked_cross_entropy_loss.1} parent=31 // pred_check
        %p580 = pneg %p130
      $region38: #{masked_cross_entropy_loss.1} parent=31 // pred_check_branch
        %582 = sbr.rel (%p580) target = $region40
      $region39: #{masked_cross_entropy_loss.1} parent=31 // pred_region
        _
      $region40: #{masked_cross_entropy_loss.1} parent=31 // pred_fallthru
        _
      // Predicated region
      $region41: #{masked_cross_entropy_loss.1} parent=31 // pred_check
        %p583 = pneg %p156
      $region42: #{masked_cross_entropy_loss.1} parent=31 // pred_check_branch
        %585 = sbr.rel (%p583) target = $region44
      $region43: #{masked_cross_entropy_loss.1} parent=31 // pred_region
        _
      $region44: #{masked_cross_entropy_loss.1} parent=31 // pred_fallthru
        _
    $region32: #{masked_cross_entropy_loss.1} parent=5 // pred_fallthru
      _
    %p586 = scmp.le.s32.totalorder 2, %s11
    // Predicated region
    $region45: #{masked_cross_entropy_loss.1} parent=5 // pred_check
      %p587 = pneg %p586
    $region46: #{masked_cross_entropy_loss.1} parent=5 // pred_check_branch
      %589 = sbr.rel (%p587) target = $region48
    $region47: #{masked_cross_entropy_loss.1} parent=5 // pred_region
      %s590 = ssub.s32 %s11, 2
      // Predicated region
      $region49: #{masked_cross_entropy_loss.1} parent=47 // pred_check
        %p591 = pneg %p136
      $region50: #{masked_cross_entropy_loss.1} parent=47 // pred_check_branch
        %593 = sbr.rel (%p591) target = $region52
      $region51: #{masked_cross_entropy_loss.1} parent=47 // pred_region
        %p594 = scmp.lt.s32.totalorder %s22, 1
        %s595 = scalar_select %p594, %s22, 1
        %s596 = scalar_lea.vmem %s3, %s595
      $region52: #{masked_cross_entropy_loss.1} parent=47 // pred_fallthru
        _
      // Predicated region
      $region53: #{masked_cross_entropy_loss.1} parent=47 // pred_check
        %p597 = pneg %p162
      $region54: #{masked_cross_entropy_loss.1} parent=47 // pred_check_branch
        %599 = sbr.rel (%p597) target = $region56
      $region55: #{masked_cross_entropy_loss.1} parent=47 // pred_region
        %p600 = scmp.lt.s32.totalorder %s22, 1
        %s601 = scalar_select %p600, %s22, 1
        %s602 = scalar_lea.vmem %s4, %s601
      $region56: #{masked_cross_entropy_loss.1} parent=47 // pred_fallthru
        _
    $region48: #{masked_cross_entropy_loss.1} parent=5 // pred_fallthru
      _
  $region6: #{masked_cross_entropy_loss.1} parent=0 // loop_footer
    %s15 = sadd.s32 1, %s11
  $region7: #{masked_cross_entropy_loss.1} parent=0 // loop_footer_branch
    %10 = sbr.rel target = $region3
  $region8: #{masked_cross_entropy_loss.1} parent=0 // loop_exit
    _

</llo_original>
